<compile_context>
chip_gen: v7x
topology: tpu7x:2x2x1
jax: 0.10.0
libtpu: 0.0.40
codegen_flags: <defaults>
</compile_context>

<pallas_src>
import functools

import jax
import jax.numpy as jnp
from jax.experimental import pallas as pl
from jax.experimental.pallas import tpu as pltpu


def _round_up(x, m):
    return ((x + m - 1) // m) * m


def _vmem_budget():
    """Generation-aware (vmem_limit_bytes, byte budget for the 2x2 input buffers)."""
    try:
        phys = int(pltpu.get_tpu_info().vmem_capacity_bytes)
    except Exception:  # conservative fallback sized for v7x (64 MiB / TC)
        phys = 64 * 1024 * 1024
    vmem_limit = max(32 * 1024 * 1024, (phys * 3) // 4)  # 48 MiB v7x, 96 MiB v5e/v6e
    # 2 inputs x 2 pipeline buffers must fit under the limit with headroom for
    # the accumulator scratch, the tiny output and compiler-internal scratch.
    input_budget = max(8 * 1024 * 1024, vmem_limit - 16 * 1024 * 1024)
    return vmem_limit, input_budget


def _widen(x):
    """Widen sub-32-bit class ids in VMEM; HBM traffic stays at native width."""
    if jnp.issubdtype(x.dtype, jnp.floating):
        return x.astype(jnp.float32)
    return x.astype(jnp.int32)


def _accumulate(outs, labs, acc_ref, num_classes, row_valid):
    """Add this tile's per-class sublane-reduced partial rows into acc_ref.

    acc_ref : (3, num_classes, W) f32 — [0]=intersection, [1]=pred sum, [2]=label sum.
    row_valid : None (full tile) or (tile_h, W) bool validity mask.
    Only `l_eq` and `liver` need masking: inter uses lf, psum uses liverf and
    lsum uses lf, so garbage rows in a partial DMA block contribute exactly 0.
    """
    liver = labs > 0
    if row_valid is not None:
        liver = jnp.logical_and(liver, row_valid)
    liverf = liver.astype(jnp.float32)  # hoisted out of the class loop
    for c in range(1, num_classes + 1):
        o_eq = outs == c
        l_eq = labs == c
        if row_valid is not None:
            l_eq = jnp.logical_and(l_eq, row_valid)
        of = o_eq.astype(jnp.float32)
        lf = l_eq.astype(jnp.float32)
        # Immediate lane-dense RMW per class keeps the live vreg set small
        # (no big end-of-step concatenate -> no spills).
        acc_ref[0, c - 1:c, :] += jnp.sum(of * lf, axis=0, keepdims=True)
        acc_ref[1, c - 1:c, :] += jnp.sum(of * liverf, axis=0, keepdims=True)
        acc_ref[2, c - 1:c, :] += jnp.sum(lf, axis=0, keepdims=True)


def _dice_sums_kernel(outs_ref, labs_ref, out_ref, acc_ref, *,
                      num_classes, valid_h, tile_h, steps_per_split):
    """Grid (num_splits, steps_per_split); emits (3, NC) partial sums per split."""
    s = pl.program_id(0)
    t = pl.program_id(1)

    @pl.when(t == 0)
    def _init():
        acc_ref[...] = jnp.zeros_like(acc_ref)

    outs = _widen(outs_ref[0])
    labs = _widen(labs_ref[0])

    # Unclamped global row offset of this step's tile.  The last (ragged) tile
    # of the image and any fully-out-of-range step (odd tile count split across
    # two cores; its index_map is clamped) carry unspecified rows past
    # `valid_h`, so they take the masked branch; full tiles pay nothing extra.
    row_start = (s * steps_per_split + t) * tile_h
    ragged = row_start + tile_h > valid_h

    @pl.when(jnp.logical_not(ragged))
    def _full_tile():
        _accumulate(outs, labs, acc_ref, num_classes, None)

    @pl.when(ragged)
    def _ragged_tile():
        row_ids = jax.lax.broadcasted_iota(jnp.int32, outs.shape, 0)
        _accumulate(outs, labs, acc_ref, num_classes,
                    row_ids < (valid_h - row_start))

    @pl.when(t == steps_per_split - 1)
    def _finalize():
        # One cross-lane reduce per (quantity, class) row, once per split.
        out_ref[0] = jnp.sum(acc_ref[...], axis=2)


@functools.partial(jax.jit, static_argnames=("num_classes", "tile_h"))
def section_seg_multiclass_dice(outs, labs, *, num_classes, tile_h=None):
    """Per-class dice scores followed by their mean, shape (num_classes + 1,) f32.

    outs / labs: [1, H, W] class-id maps in any integer or float dtype (passed
    to the kernel in their native width).  `num_classes` must be a static
    Python int resolved on the host (mirrors `round(labs.max().item())`).
    """
    assert outs.ndim == 3 and outs.shape == labs.shape and outs.shape[0] == 1
    assert num_classes >= 1
    _, H, W = outs.shape
    item_bytes = outs.dtype.itemsize + labs.dtype.itemsize

    vmem_limit, input_budget = _vmem_budget()
    rows_cap = max(8, (input_budget // (2 * W * item_bytes)) // 8 * 8)
    if tile_h is not None:
        th = max(8, (int(tile_h) // 8) * 8)
        tile_h = H if th >= H else th
    elif H <= rows_cap:
        tile_h = H          # single full-extent row tile (no masking needed)
    else:
        tile_h = rows_cap   # multiple of 8, < H

    steps_total = pl.cdiv(H, tile_h)
    # Leading "parallel" axis: the two v7x TensorCores each take half the row
    # tiles (a harmless sequential pass on 1-TC chips).  Odd small tile counts
    # would waste one fully-masked duplicate tile fetch, so only split when it
    # is free (even count) or cheap (>= 8 tiles).
    # TODO(synk): query the physical TensorCore count instead of this heuristic.
    num_splits = 2 if (steps_total >= 2 and
                       (steps_total % 2 == 0 or steps_total >= 8)) else 1
    steps_per_split = pl.cdiv(steps_total, num_splits)
    last_block = steps_total - 1

    def in_map(s, t):
        # Clamp so a fully-out-of-range step re-fetches the last real tile;
        # the kernel's row mask zeroes its contribution.
        return (0, jnp.minimum(s * steps_per_split + t, last_block), 0)

    kernel = functools.partial(
        _dice_sums_kernel, num_classes=num_classes, valid_h=H,
        tile_h=tile_h, steps_per_split=steps_per_split)

    flops = (10 * num_classes + 4) * H * W
    bytes_accessed = H * W * item_bytes + num_splits * 3 * num_classes * 4

    sums = pl.pallas_call(
        kernel,
        out_shape=jax.ShapeDtypeStruct((num_splits, 3, num_classes), jnp.float32),
        grid_spec=pltpu.PrefetchScalarGridSpec(
            num_scalar_prefetch=0,
            grid=(num_splits, steps_per_split),
            in_specs=[
                pl.BlockSpec((1, tile_h, W), in_map),   # outs (native dtype)
                pl.BlockSpec((1, tile_h, W), in_map),   # labs (native dtype)
            ],
            out_specs=pl.BlockSpec((1, 3, num_classes), lambda s, t: (s, 0, 0)),
            scratch_shapes=[pltpu.VMEM((3, num_classes, W), jnp.float32)],
        ),
        compiler_params=pltpu.CompilerParams(
            dimension_semantics=("parallel", "arbitrary"),
            vmem_limit_bytes=vmem_limit),
        cost_estimate=pl.CostEstimate(
            flops=flops, transcendentals=0, bytes_accessed=bytes_accessed),
    )(outs, labs)

    # Tiny finalize (combine the per-core splits + dice formula) in the wrapper.
    totals = jnp.sum(sums, axis=0)                 # (3, NC)
    inter, psum, lsum = totals[0], totals[1], totals[2]
    eps = jnp.float32(0.0001)
    dice = (2.0 * inter + eps) / (psum + lsum + eps)
    return jnp.concatenate([dice, jnp.mean(dice, keepdims=True)])


def _reference(outs, labs, num_classes):
    """Pure-JAX mirror of the PyTorch forward."""
    pred = outs[0].astype(jnp.float32)
    lab = labs[0].astype(jnp.float32)
    liver = (lab > 0).astype(jnp.float32)
    scores = []
    total = 0.0
    for i in range(1, num_classes + 1):
        cl = (lab == i).astype(jnp.float32)
        co = (pred == i).astype(jnp.float32) * liver
        d = (2.0 * jnp.sum(co * cl) + 0.0001) / (jnp.sum(co) + jnp.sum(cl) + 0.0001)
        scores.append(d)
        total = total + d
    scores.append(total / num_classes)
    return jnp.stack(scores)


if __name__ == "__main__":
    import numpy as np

    key = jax.random.PRNGKey(0)
    ks = jax.random.split(key, 6)

    def check(outs, labs, **kw):
        # Host-side class count, mirrors `round(labs.max().item())` (device sync).
        nc = int(round(float(jnp.max(labs))))
        got = jax.block_until_ready(
            section_seg_multiclass_dice(outs, labs, num_classes=nc, **kw))
        ref = _reference(outs, labs, nc)
        assert np.allclose(np.asarray(got), np.asarray(ref),
                           rtol=1e-5, atol=1e-6), (got, ref)
        return got, nc

    # A: f32 class maps, image fits one tile -> grid (1, 1), no masking at all.
    labs_a = jax.random.randint(ks[0], (1, 16, 128), 0, 5).astype(jnp.float32)
    outs_a = jax.random.randint(ks[1], (1, 16, 128), 0, 5).astype(jnp.float32)
    dice_a, nc_a = check(outs_a, labs_a)

    # B: int8 class ids (narrow native dtype in HBM), ragged H=70, W=200 not a
    #    multiple of 128, forced 8-row tiles -> 9 tiles -> 2-way split with one
    #    clamped fully-masked step and one ragged edge tile.
    labs_b = jax.random.randint(ks[2], (1, 70, 200), 0, 4).astype(jnp.int8)
    outs_b = jax.random.randint(ks[3], (1, 70, 200), 0, 4).astype(jnp.int8)
    check(outs_b, labs_b, tile_h=8)

    # C: int32 ids, even tile count -> clean 2-way split, no masking anywhere.
    labs_c = jax.random.randint(ks[4], (1, 64, 256), 0, 4)
    outs_c = jax.random.randint(ks[5], (1, 64, 256), 0, 4)
    check(outs_c, labs_c, tile_h=16)

    # The PyTorch module returns a Python list: per-class scores + their average.
    multi_class_dice_score_list = [dice_a[i] for i in range(nc_a)] + [dice_a[nc_a]]
    assert len(multi_class_dice_score_list) == nc_a + 1

    print("KERNEL_OK")
</pallas_src>

<mosaic_0001>
module attributes {stable_mosaic.version = 11 : i64} {
  func.func @_dice_sums_kernel(%arg0: i32, %arg1: i32, %arg2: memref<1x16x128xf32, #tpu.memory_space<vmem>>, %arg3: memref<1x16x128xf32, #tpu.memory_space<vmem>>, %arg4: memref<1x3x4xf32, #tpu.memory_space<vmem>>, %arg5: memref<3x4x128xf32, #tpu.memory_space<vmem>>) attributes {dimension_semantics = [#tpu.dimension_semantics<parallel>, #tpu.dimension_semantics<arbitrary>], iteration_bounds = array<i64: 1, 1>, scalar_prefetch = 0 : i64, scratch_operands = 1 : i64, tpu.core_type = #tpu.core_type<tc>, window_params = [{transform_indices = @transform_0, window_bounds = array<i64: 1, 16, 128>}, {transform_indices = @transform_1, window_bounds = array<i64: 1, 16, 128>}, {transform_indices = @transform_2, window_bounds = array<i64: 1, 3, 4>}]} {
    %c0_i32 = arith.constant 0 : i32
    %0 = arith.cmpi eq, %arg1, %c0_i32 : i32
    %1 = arith.extui %0 : i1 to i32
    %c0_i32_0 = arith.constant 0 : i32
    %2 = arith.cmpi ne, %1, %c0_i32_0 : i32
    scf.if %2 {
      %cst = arith.constant 0.000000e+00 : f32
      %20 = vector.broadcast %cst : f32 to vector<3x4x128xf32>
      %c0_12 = arith.constant 0 : index
      %c0_13 = arith.constant 0 : index
      %c0_14 = arith.constant 0 : index
      %21 = vector.load %arg5[%c0_12, %c0_13, %c0_14] : memref<3x4x128xf32, #tpu.memory_space<vmem>>, vector<3x4x128xf32>
      tpu.vector_store %arg5[%c0_12, %c0_13, %c0_14], %20 {strides = array<i32>} : memref<3x4x128xf32, #tpu.memory_space<vmem>>, vector<3x4x128xf32>,
    } else {
    }
    %c0 = arith.constant 0 : index
    %c0_1 = arith.constant 0 : index
    %c0_2 = arith.constant 0 : index
    %3 = vector.load %arg2[%c0, %c0_1, %c0_2] : memref<1x16x128xf32, #tpu.memory_space<vmem>>, vector<1x16x128xf32>
    %4 = vector.shape_cast %3 : vector<1x16x128xf32> to vector<16x128xf32>
    %c0_3 = arith.constant 0 : index
    %c0_4 = arith.constant 0 : index
    %c0_5 = arith.constant 0 : index
    %5 = vector.load %arg3[%c0_3, %c0_4, %c0_5] : memref<1x16x128xf32, #tpu.memory_space<vmem>>, vector<1x16x128xf32>
    %6 = vector.shape_cast %5 : vector<1x16x128xf32> to vector<16x128xf32>
    %c1_i32 = arith.constant 1 : i32
    %7 = arith.muli %arg0, %c1_i32 : i32
    %8 = arith.addi %7, %arg1 : i32
    %c16_i32 = arith.constant 16 : i32
    %9 = arith.muli %8, %c16_i32 : i32
    %c16_i32_6 = arith.constant 16 : i32
    %10 = arith.addi %9, %c16_i32_6 : i32
    %c16_i32_7 = arith.constant 16 : i32
    %11 = arith.cmpi sgt, %10, %c16_i32_7 : i32
    %true = arith.constant true
    %12 = arith.xori %11, %true : i1
    %13 = arith.extui %12 : i1 to i32
    %c0_i32_8 = arith.constant 0 : i32
    %14 = arith.cmpi ne, %13, %c0_i32_8 : i32
    scf.if %14 {
      %cst = arith.constant 0.000000e+00 : f32
      %20 = vector.broadcast %cst : f32 to vector<16x128xf32>
      %21 = arith.cmpf ogt, %6, %20 : vector<16x128xf32>
      %22 = arith.extui %21 : vector<16x128xi1> to vector<16x128xi32>
      %23 = arith.sitofp %22 : vector<16x128xi32> to vector<16x128xf32>
      %cst_12 = arith.constant 1.000000e+00 : f32
      %24 = vector.broadcast %cst_12 : f32 to vector<16x128xf32>
      %25 = arith.cmpf oeq, %4, %24 : vector<16x128xf32>
      %cst_13 = arith.constant 1.000000e+00 : f32
      %26 = vector.broadcast %cst_13 : f32 to vector<16x128xf32>
      %27 = arith.cmpf oeq, %6, %26 : vector<16x128xf32>
      %28 = arith.extui %25 : vector<16x128xi1> to vector<16x128xi32>
      %29 = arith.sitofp %28 : vector<16x128xi32> to vector<16x128xf32>
      %30 = arith.extui %27 : vector<16x128xi1> to vector<16x128xi32>
      %31 = arith.sitofp %30 : vector<16x128xi32> to vector<16x128xf32>
      %c0_14 = arith.constant 0 : index
      %c0_15 = arith.constant 0 : index
      %c0_16 = arith.constant 0 : index
      %32 = vector.load %arg5[%c0_14, %c0_15, %c0_16] : memref<3x4x128xf32, #tpu.memory_space<vmem>>, vector<1x1x128xf32>
      %33 = vector.shape_cast %32 : vector<1x1x128xf32> to vector<1x128xf32>
      %34 = arith.mulf %29, %31 : vector<16x128xf32>
      %cst_17 = arith.constant dense<0.000000e+00> : vector<128xf32>
      %35 = vector.multi_reduction <add>, %34, %cst_17 [0] : vector<16x128xf32> to vector<128xf32>
      %36 = vector.shape_cast %35 : vector<128xf32> to vector<1x128xf32>
      %37 = arith.addf %33, %36 : vector<1x128xf32>
      %c0_18 = arith.constant 0 : index
      %c0_19 = arith.constant 0 : index
      %c0_20 = arith.constant 0 : index
      %38 = vector.load %arg5[%c0_18, %c0_19, %c0_20] : memref<3x4x128xf32, #tpu.memory_space<vmem>>, vector<1x1x128xf32>
      %39 = vector.shape_cast %38 : vector<1x1x128xf32> to vector<1x128xf32>
      %40 = vector.shape_cast %37 : vector<1x128xf32> to vector<1x1x128xf32>
      tpu.vector_store %arg5[%c0_18, %c0_19, %c0_20], %40 {strides = array<i32>} : memref<3x4x128xf32, #tpu.memory_space<vmem>>, vector<1x1x128xf32>,
      %c1 = arith.constant 1 : index
      %c0_21 = arith.constant 0 : index
      %c0_22 = arith.constant 0 : index
      %41 = vector.load %arg5[%c1, %c0_21, %c0_22] : memref<3x4x128xf32, #tpu.memory_space<vmem>>, vector<1x1x128xf32>
      %42 = vector.shape_cast %41 : vector<1x1x128xf32> to vector<1x128xf32>
      %43 = arith.mulf %29, %23 : vector<16x128xf32>
      %cst_23 = arith.constant dense<0.000000e+00> : vector<128xf32>
      %44 = vector.multi_reduction <add>, %43, %cst_23 [0] : vector<16x128xf32> to vector<128xf32>
      %45 = vector.shape_cast %44 : vector<128xf32> to vector<1x128xf32>
      %46 = arith.addf %42, %45 : vector<1x128xf32>
      %c1_24 = arith.constant 1 : index
      %c0_25 = arith.constant 0 : index
      %c0_26 = arith.constant 0 : index
      %47 = vector.load %arg5[%c1_24, %c0_25, %c0_26] : memref<3x4x128xf32, #tpu.memory_space<vmem>>, vector<1x1x128xf32>
      %48 = vector.shape_cast %47 : vector<1x1x128xf32> to vector<1x128xf32>
      %49 = vector.shape_cast %46 : vector<1x128xf32> to vector<1x1x128xf32>
      tpu.vector_store %arg5[%c1_24, %c0_25, %c0_26], %49 {strides = array<i32>} : memref<3x4x128xf32, #tpu.memory_space<vmem>>, vector<1x1x128xf32>,
      %c2 = arith.constant 2 : index
      %c0_27 = arith.constant 0 : index
      %c0_28 = arith.constant 0 : index
      %50 = vector.load %arg5[%c2, %c0_27, %c0_28] : memref<3x4x128xf32, #tpu.memory_space<vmem>>, vector<1x1x128xf32>
      %51 = vector.shape_cast %50 : vector<1x1x128xf32> to vector<1x128xf32>
      %cst_29 = arith.constant dense<0.000000e+00> : vector<128xf32>
      %52 = vector.multi_reduction <add>, %31, %cst_29 [0] : vector<16x128xf32> to vector<128xf32>
      %53 = vector.shape_cast %52 : vector<128xf32> to vector<1x128xf32>
      %54 = arith.addf %51, %53 : vector<1x128xf32>
      %c2_30 = arith.constant 2 : index
      %c0_31 = arith.constant 0 : index
      %c0_32 = arith.constant 0 : index
      %55 = vector.load %arg5[%c2_30, %c0_31, %c0_32] : memref<3x4x128xf32, #tpu.memory_space<vmem>>, vector<1x1x128xf32>
      %56 = vector.shape_cast %55 : vector<1x1x128xf32> to vector<1x128xf32>
      %57 = vector.shape_cast %54 : vector<1x128xf32> to vector<1x1x128xf32>
      tpu.vector_store %arg5[%c2_30, %c0_31, %c0_32], %57 {strides = array<i32>} : memref<3x4x128xf32, #tpu.memory_space<vmem>>, vector<1x1x128xf32>,
      %cst_33 = arith.constant 2.000000e+00 : f32
      %58 = vector.broadcast %cst_33 : f32 to vector<16x128xf32>
      %59 = arith.cmpf oeq, %4, %58 : vector<16x128xf32>
      %cst_34 = arith.constant 2.000000e+00 : f32
      %60 = vector.broadcast %cst_34 : f32 to vector<16x128xf32>
      %61 = arith.cmpf oeq, %6, %60 : vector<16x128xf32>
      %62 = arith.extui %59 : vector<16x128xi1> to vector<16x128xi32>
      %63 = arith.sitofp %62 : vector<16x128xi32> to vector<16x128xf32>
      %64 = arith.extui %61 : vector<16x128xi1> to vector<16x128xi32>
      %65 = arith.sitofp %64 : vector<16x128xi32> to vector<16x128xf32>
      %c0_35 = arith.constant 0 : index
      %c1_36 = arith.constant 1 : index
      %c0_37 = arith.constant 0 : index
      %66 = vector.load %arg5[%c0_35, %c1_36, %c0_37] : memref<3x4x128xf32, #tpu.memory_space<vmem>>, vector<1x1x128xf32>
      %67 = vector.shape_cast %66 : vector<1x1x128xf32> to vector<1x128xf32>
      %68 = arith.mulf %63, %65 : vector<16x128xf32>
      %cst_38 = arith.constant dense<0.000000e+00> : vector<128xf32>
      %69 = vector.multi_reduction <add>, %68, %cst_38 [0] : vector<16x128xf32> to vector<128xf32>
      %70 = vector.shape_cast %69 : vector<128xf32> to vector<1x128xf32>
      %71 = arith.addf %67, %70 : vector<1x128xf32>
      %c0_39 = arith.constant 0 : index
      %c1_40 = arith.constant 1 : index
      %c0_41 = arith.constant 0 : index
      %72 = vector.load %arg5[%c0_39, %c1_40, %c0_41] : memref<3x4x128xf32, #tpu.memory_space<vmem>>, vector<1x1x128xf32>
      %73 = vector.shape_cast %72 : vector<1x1x128xf32> to vector<1x128xf32>
      %74 = vector.shape_cast %71 : vector<1x128xf32> to vector<1x1x128xf32>
      tpu.vector_store %arg5[%c0_39, %c1_40, %c0_41], %74 {strides = array<i32>} : memref<3x4x128xf32, #tpu.memory_space<vmem>>, vector<1x1x128xf32>,
      %c1_42 = arith.constant 1 : index
      %c1_43 = arith.constant 1 : index
      %c0_44 = arith.constant 0 : index
      %75 = vector.load %arg5[%c1_42, %c1_43, %c0_44] : memref<3x4x128xf32, #tpu.memory_space<vmem>>, vector<1x1x128xf32>
      %76 = vector.shape_cast %75 : vector<1x1x128xf32> to vector<1x128xf32>
      %77 = arith.mulf %63, %23 : vector<16x128xf32>
      %cst_45 = arith.constant dense<0.000000e+00> : vector<128xf32>
      %78 = vector.multi_reduction <add>, %77, %cst_45 [0] : vector<16x128xf32> to vector<128xf32>
      %79 = vector.shape_cast %78 : vector<128xf32> to vector<1x128xf32>
      %80 = arith.addf %76, %79 : vector<1x128xf32>
      %c1_46 = arith.constant 1 : index
      %c1_47 = arith.constant 1 : index
      %c0_48 = arith.constant 0 : index
      %81 = vector.load %arg5[%c1_46, %c1_47, %c0_48] : memref<3x4x128xf32, #tpu.memory_space<vmem>>, vector<1x1x128xf32>
      %82 = vector.shape_cast %81 : vector<1x1x128xf32> to vector<1x128xf32>
      %83 = vector.shape_cast %80 : vector<1x128xf32> to vector<1x1x128xf32>
      tpu.vector_store %arg5[%c1_46, %c1_47, %c0_48], %83 {strides = array<i32>} : memref<3x4x128xf32, #tpu.memory_space<vmem>>, vector<1x1x128xf32>,
      %c2_49 = arith.constant 2 : index
      %c1_50 = arith.constant 1 : index
      %c0_51 = arith.constant 0 : index
      %84 = vector.load %arg5[%c2_49, %c1_50, %c0_51] : memref<3x4x128xf32, #tpu.memory_space<vmem>>, vector<1x1x128xf32>
      %85 = vector.shape_cast %84 : vector<1x1x128xf32> to vector<1x128xf32>
      %cst_52 = arith.constant dense<0.000000e+00> : vector<128xf32>
      %86 = vector.multi_reduction <add>, %65, %cst_52 [0] : vector<16x128xf32> to vector<128xf32>
      %87 = vector.shape_cast %86 : vector<128xf32> to vector<1x128xf32>
      %88 = arith.addf %85, %87 : vector<1x128xf32>
      %c2_53 = arith.constant 2 : index
      %c1_54 = arith.constant 1 : index
      %c0_55 = arith.constant 0 : index
      %89 = vector.load %arg5[%c2_53, %c1_54, %c0_55] : memref<3x4x128xf32, #tpu.memory_space<vmem>>, vector<1x1x128xf32>
      %90 = vector.shape_cast %89 : vector<1x1x128xf32> to vector<1x128xf32>
      %91 = vector.shape_cast %88 : vector<1x128xf32> to vector<1x1x128xf32>
      tpu.vector_store %arg5[%c2_53, %c1_54, %c0_55], %91 {strides = array<i32>} : memref<3x4x128xf32, #tpu.memory_space<vmem>>, vector<1x1x128xf32>,
      %cst_56 = arith.constant 3.000000e+00 : f32
      %92 = vector.broadcast %cst_56 : f32 to vector<16x128xf32>
      %93 = arith.cmpf oeq, %4, %92 : vector<16x128xf32>
      %cst_57 = arith.constant 3.000000e+00 : f32
      %94 = vector.broadcast %cst_57 : f32 to vector<16x128xf32>
      %95 = arith.cmpf oeq, %6, %94 : vector<16x128xf32>
      %96 = arith.extui %93 : vector<16x128xi1> to vector<16x128xi32>
      %97 = arith.sitofp %96 : vector<16x128xi32> to vector<16x128xf32>
      %98 = arith.extui %95 : vector<16x128xi1> to vector<16x128xi32>
      %99 = arith.sitofp %98 : vector<16x128xi32> to vector<16x128xf32>
      %c0_58 = arith.constant 0 : index
      %c2_59 = arith.constant 2 : index
      %c0_60 = arith.constant 0 : index
      %100 = vector.load %arg5[%c0_58, %c2_59, %c0_60] : memref<3x4x128xf32, #tpu.memory_space<vmem>>, vector<1x1x128xf32>
      %101 = vector.shape_cast %100 : vector<1x1x128xf32> to vector<1x128xf32>
      %102 = arith.mulf %97, %99 : vector<16x128xf32>
      %cst_61 = arith.constant dense<0.000000e+00> : vector<128xf32>
      %103 = vector.multi_reduction <add>, %102, %cst_61 [0] : vector<16x128xf32> to vector<128xf32>
      %104 = vector.shape_cast %103 : vector<128xf32> to vector<1x128xf32>
      %105 = arith.addf %101, %104 : vector<1x128xf32>
      %c0_62 = arith.constant 0 : index
      %c2_63 = arith.constant 2 : index
      %c0_64 = arith.constant 0 : index
      %106 = vector.load %arg5[%c0_62, %c2_63, %c0_64] : memref<3x4x128xf32, #tpu.memory_space<vmem>>, vector<1x1x128xf32>
      %107 = vector.shape_cast %106 : vector<1x1x128xf32> to vector<1x128xf32>
      %108 = vector.shape_cast %105 : vector<1x128xf32> to vector<1x1x128xf32>
      tpu.vector_store %arg5[%c0_62, %c2_63, %c0_64], %108 {strides = array<i32>} : memref<3x4x128xf32, #tpu.memory_space<vmem>>, vector<1x1x128xf32>,
      %c1_65 = arith.constant 1 : index
      %c2_66 = arith.constant 2 : index
      %c0_67 = arith.constant 0 : index
      %109 = vector.load %arg5[%c1_65, %c2_66, %c0_67] : memref<3x4x128xf32, #tpu.memory_space<vmem>>, vector<1x1x128xf32>
      %110 = vector.shape_cast %109 : vector<1x1x128xf32> to vector<1x128xf32>
      %111 = arith.mulf %97, %23 : vector<16x128xf32>
      %cst_68 = arith.constant dense<0.000000e+00> : vector<128xf32>
      %112 = vector.multi_reduction <add>, %111, %cst_68 [0] : vector<16x128xf32> to vector<128xf32>
      %113 = vector.shape_cast %112 : vector<128xf32> to vector<1x128xf32>
      %114 = arith.addf %110, %113 : vector<1x128xf32>
      %c1_69 = arith.constant 1 : index
      %c2_70 = arith.constant 2 : index
      %c0_71 = arith.constant 0 : index
      %115 = vector.load %arg5[%c1_69, %c2_70, %c0_71] : memref<3x4x128xf32, #tpu.memory_space<vmem>>, vector<1x1x128xf32>
      %116 = vector.shape_cast %115 : vector<1x1x128xf32> to vector<1x128xf32>
      %117 = vector.shape_cast %114 : vector<1x128xf32> to vector<1x1x128xf32>
      tpu.vector_store %arg5[%c1_69, %c2_70, %c0_71], %117 {strides = array<i32>} : memref<3x4x128xf32, #tpu.memory_space<vmem>>, vector<1x1x128xf32>,
      %c2_72 = arith.constant 2 : index
      %c2_73 = arith.constant 2 : index
      %c0_74 = arith.constant 0 : index
      %118 = vector.load %arg5[%c2_72, %c2_73, %c0_74] : memref<3x4x128xf32, #tpu.memory_space<vmem>>, vector<1x1x128xf32>
      %119 = vector.shape_cast %118 : vector<1x1x128xf32> to vector<1x128xf32>
      %cst_75 = arith.constant dense<0.000000e+00> : vector<128xf32>
      %120 = vector.multi_reduction <add>, %99, %cst_75 [0] : vector<16x128xf32> to vector<128xf32>
      %121 = vector.shape_cast %120 : vector<128xf32> to vector<1x128xf32>
      %122 = arith.addf %119, %121 : vector<1x128xf32>
      %c2_76 = arith.constant 2 : index
      %c2_77 = arith.constant 2 : index
      %c0_78 = arith.constant 0 : index
      %123 = vector.load %arg5[%c2_76, %c2_77, %c0_78] : memref<3x4x128xf32, #tpu.memory_space<vmem>>, vector<1x1x128xf32>
      %124 = vector.shape_cast %123 : vector<1x1x128xf32> to vector<1x128xf32>
      %125 = vector.shape_cast %122 : vector<1x128xf32> to vector<1x1x128xf32>
      tpu.vector_store %arg5[%c2_76, %c2_77, %c0_78], %125 {strides = array<i32>} : memref<3x4x128xf32, #tpu.memory_space<vmem>>, vector<1x1x128xf32>,
      %cst_79 = arith.constant 4.000000e+00 : f32
      %126 = vector.broadcast %cst_79 : f32 to vector<16x128xf32>
      %127 = arith.cmpf oeq, %4, %126 : vector<16x128xf32>
      %cst_80 = arith.constant 4.000000e+00 : f32
      %128 = vector.broadcast %cst_80 : f32 to vector<16x128xf32>
      %129 = arith.cmpf oeq, %6, %128 : vector<16x128xf32>
      %130 = arith.extui %127 : vector<16x128xi1> to vector<16x128xi32>
      %131 = arith.sitofp %130 : vector<16x128xi32> to vector<16x128xf32>
      %132 = arith.extui %129 : vector<16x128xi1> to vector<16x128xi32>
      %133 = arith.sitofp %132 : vector<16x128xi32> to vector<16x128xf32>
      %c0_81 = arith.constant 0 : index
      %c3 = arith.constant 3 : index
      %c0_82 = arith.constant 0 : index
      %134 = vector.load %arg5[%c0_81, %c3, %c0_82] : memref<3x4x128xf32, #tpu.memory_space<vmem>>, vector<1x1x128xf32>
      %135 = vector.shape_cast %134 : vector<1x1x128xf32> to vector<1x128xf32>
      %136 = arith.mulf %131, %133 : vector<16x128xf32>
      %cst_83 = arith.constant dense<0.000000e+00> : vector<128xf32>
      %137 = vector.multi_reduction <add>, %136, %cst_83 [0] : vector<16x128xf32> to vector<128xf32>
      %138 = vector.shape_cast %137 : vector<128xf32> to vector<1x128xf32>
      %139 = arith.addf %135, %138 : vector<1x128xf32>
      %c0_84 = arith.constant 0 : index
      %c3_85 = arith.constant 3 : index
      %c0_86 = arith.constant 0 : index
      %140 = vector.load %arg5[%c0_84, %c3_85, %c0_86] : memref<3x4x128xf32, #tpu.memory_space<vmem>>, vector<1x1x128xf32>
      %141 = vector.shape_cast %140 : vector<1x1x128xf32> to vector<1x128xf32>
      %142 = vector.shape_cast %139 : vector<1x128xf32> to vector<1x1x128xf32>
      tpu.vector_store %arg5[%c0_84, %c3_85, %c0_86], %142 {strides = array<i32>} : memref<3x4x128xf32, #tpu.memory_space<vmem>>, vector<1x1x128xf32>,
      %c1_87 = arith.constant 1 : index
      %c3_88 = arith.constant 3 : index
      %c0_89 = arith.constant 0 : index
      %143 = vector.load %arg5[%c1_87, %c3_88, %c0_89] : memref<3x4x128xf32, #tpu.memory_space<vmem>>, vector<1x1x128xf32>
      %144 = vector.shape_cast %143 : vector<1x1x128xf32> to vector<1x128xf32>
      %145 = arith.mulf %131, %23 : vector<16x128xf32>
      %cst_90 = arith.constant dense<0.000000e+00> : vector<128xf32>
      %146 = vector.multi_reduction <add>, %145, %cst_90 [0] : vector<16x128xf32> to vector<128xf32>
      %147 = vector.shape_cast %146 : vector<128xf32> to vector<1x128xf32>
      %148 = arith.addf %144, %147 : vector<1x128xf32>
      %c1_91 = arith.constant 1 : index
      %c3_92 = arith.constant 3 : index
      %c0_93 = arith.constant 0 : index
      %149 = vector.load %arg5[%c1_91, %c3_92, %c0_93] : memref<3x4x128xf32, #tpu.memory_space<vmem>>, vector<1x1x128xf32>
      %150 = vector.shape_cast %149 : vector<1x1x128xf32> to vector<1x128xf32>
      %151 = vector.shape_cast %148 : vector<1x128xf32> to vector<1x1x128xf32>
      tpu.vector_store %arg5[%c1_91, %c3_92, %c0_93], %151 {strides = array<i32>} : memref<3x4x128xf32, #tpu.memory_space<vmem>>, vector<1x1x128xf32>,
      %c2_94 = arith.constant 2 : index
      %c3_95 = arith.constant 3 : index
      %c0_96 = arith.constant 0 : index
      %152 = vector.load %arg5[%c2_94, %c3_95, %c0_96] : memref<3x4x128xf32, #tpu.memory_space<vmem>>, vector<1x1x128xf32>
      %153 = vector.shape_cast %152 : vector<1x1x128xf32> to vector<1x128xf32>
      %cst_97 = arith.constant dense<0.000000e+00> : vector<128xf32>
      %154 = vector.multi_reduction <add>, %133, %cst_97 [0] : vector<16x128xf32> to vector<128xf32>
      %155 = vector.shape_cast %154 : vector<128xf32> to vector<1x128xf32>
      %156 = arith.addf %153, %155 : vector<1x128xf32>
      %c2_98 = arith.constant 2 : index
      %c3_99 = arith.constant 3 : index
      %c0_100 = arith.constant 0 : index
      %157 = vector.load %arg5[%c2_98, %c3_99, %c0_100] : memref<3x4x128xf32, #tpu.memory_space<vmem>>, vector<1x1x128xf32>
      %158 = vector.shape_cast %157 : vector<1x1x128xf32> to vector<1x128xf32>
      %159 = vector.shape_cast %156 : vector<1x128xf32> to vector<1x1x128xf32>
      tpu.vector_store %arg5[%c2_98, %c3_99, %c0_100], %159 {strides = array<i32>} : memref<3x4x128xf32, #tpu.memory_space<vmem>>, vector<1x1x128xf32>,
    } else {
    }
    %15 = arith.extui %11 : i1 to i32
    %c0_i32_9 = arith.constant 0 : i32
    %16 = arith.cmpi ne, %15, %c0_i32_9 : i32
    scf.if %16 {
      %20 = tpu.iota {dimensions = array<i32: 0>} : vector<16x128xi32>
      %c16_i32_12 = arith.constant 16 : i32
      %21 = arith.subi %c16_i32_12, %9 : i32
      %22 = vector.broadcast %21 : i32 to vector<16x128xi32>
      %23 = arith.cmpi slt, %20, %22 : vector<16x128xi32>
      %cst = arith.constant 0.000000e+00 : f32
      %24 = vector.broadcast %cst : f32 to vector<16x128xf32>
      %25 = arith.cmpf ogt, %6, %24 : vector<16x128xf32>
      %26 = arith.andi %25, %23 : vector<16x128xi1>
      %27 = arith.extui %26 : vector<16x128xi1> to vector<16x128xi32>
      %28 = arith.sitofp %27 : vector<16x128xi32> to vector<16x128xf32>
      %cst_13 = arith.constant 1.000000e+00 : f32
      %29 = vector.broadcast %cst_13 : f32 to vector<16x128xf32>
      %30 = arith.cmpf oeq, %4, %29 : vector<16x128xf32>
      %cst_14 = arith.constant 1.000000e+00 : f32
      %31 = vector.broadcast %cst_14 : f32 to vector<16x128xf32>
      %32 = arith.cmpf oeq, %6, %31 : vector<16x128xf32>
      %33 = arith.andi %32, %23 : vector<16x128xi1>
      %34 = arith.extui %30 : vector<16x128xi1> to vector<16x128xi32>
      %35 = arith.sitofp %34 : vector<16x128xi32> to vector<16x128xf32>
      %36 = arith.extui %33 : vector<16x128xi1> to vector<16x128xi32>
      %37 = arith.sitofp %36 : vector<16x128xi32> to vector<16x128xf32>
      %c0_15 = arith.constant 0 : index
      %c0_16 = arith.constant 0 : index
      %c0_17 = arith.constant 0 : index
      %38 = vector.load %arg5[%c0_15, %c0_16, %c0_17] : memref<3x4x128xf32, #tpu.memory_space<vmem>>, vector<1x1x128xf32>
      %39 = vector.shape_cast %38 : vector<1x1x128xf32> to vector<1x128xf32>
      %40 = arith.mulf %35, %37 : vector<16x128xf32>
      %cst_18 = arith.constant dense<0.000000e+00> : vector<128xf32>
      %41 = vector.multi_reduction <add>, %40, %cst_18 [0] : vector<16x128xf32> to vector<128xf32>
      %42 = vector.shape_cast %41 : vector<128xf32> to vector<1x128xf32>
      %43 = arith.addf %39, %42 : vector<1x128xf32>
      %c0_19 = arith.constant 0 : index
      %c0_20 = arith.constant 0 : index
      %c0_21 = arith.constant 0 : index
      %44 = vector.load %arg5[%c0_19, %c0_20, %c0_21] : memref<3x4x128xf32, #tpu.memory_space<vmem>>, vector<1x1x128xf32>
      %45 = vector.shape_cast %44 : vector<1x1x128xf32> to vector<1x128xf32>
      %46 = vector.shape_cast %43 : vector<1x128xf32> to vector<1x1x128xf32>
      tpu.vector_store %arg5[%c0_19, %c0_20, %c0_21], %46 {strides = array<i32>} : memref<3x4x128xf32, #tpu.memory_space<vmem>>, vector<1x1x128xf32>,
      %c1 = arith.constant 1 : index
      %c0_22 = arith.constant 0 : index
      %c0_23 = arith.constant 0 : index
      %47 = vector.load %arg5[%c1, %c0_22, %c0_23] : memref<3x4x128xf32, #tpu.memory_space<vmem>>, vector<1x1x128xf32>
      %48 = vector.shape_cast %47 : vector<1x1x128xf32> to vector<1x128xf32>
      %49 = arith.mulf %35, %28 : vector<16x128xf32>
      %cst_24 = arith.constant dense<0.000000e+00> : vector<128xf32>
      %50 = vector.multi_reduction <add>, %49, %cst_24 [0] : vector<16x128xf32> to vector<128xf32>
      %51 = vector.shape_cast %50 : vector<128xf32> to vector<1x128xf32>
      %52 = arith.addf %48, %51 : vector<1x128xf32>
      %c1_25 = arith.constant 1 : index
      %c0_26 = arith.constant 0 : index
      %c0_27 = arith.constant 0 : index
      %53 = vector.load %arg5[%c1_25, %c0_26, %c0_27] : memref<3x4x128xf32, #tpu.memory_space<vmem>>, vector<1x1x128xf32>
      %54 = vector.shape_cast %53 : vector<1x1x128xf32> to vector<1x128xf32>
      %55 = vector.shape_cast %52 : vector<1x128xf32> to vector<1x1x128xf32>
      tpu.vector_store %arg5[%c1_25, %c0_26, %c0_27], %55 {strides = array<i32>} : memref<3x4x128xf32, #tpu.memory_space<vmem>>, vector<1x1x128xf32>,
      %c2 = arith.constant 2 : index
      %c0_28 = arith.constant 0 : index
      %c0_29 = arith.constant 0 : index
      %56 = vector.load %arg5[%c2, %c0_28, %c0_29] : memref<3x4x128xf32, #tpu.memory_space<vmem>>, vector<1x1x128xf32>
      %57 = vector.shape_cast %56 : vector<1x1x128xf32> to vector<1x128xf32>
      %cst_30 = arith.constant dense<0.000000e+00> : vector<128xf32>
      %58 = vector.multi_reduction <add>, %37, %cst_30 [0] : vector<16x128xf32> to vector<128xf32>
      %59 = vector.shape_cast %58 : vector<128xf32> to vector<1x128xf32>
      %60 = arith.addf %57, %59 : vector<1x128xf32>
      %c2_31 = arith.constant 2 : index
      %c0_32 = arith.constant 0 : index
      %c0_33 = arith.constant 0 : index
      %61 = vector.load %arg5[%c2_31, %c0_32, %c0_33] : memref<3x4x128xf32, #tpu.memory_space<vmem>>, vector<1x1x128xf32>
      %62 = vector.shape_cast %61 : vector<1x1x128xf32> to vector<1x128xf32>
      %63 = vector.shape_cast %60 : vector<1x128xf32> to vector<1x1x128xf32>
      tpu.vector_store %arg5[%c2_31, %c0_32, %c0_33], %63 {strides = array<i32>} : memref<3x4x128xf32, #tpu.memory_space<vmem>>, vector<1x1x128xf32>,
      %cst_34 = arith.constant 2.000000e+00 : f32
      %64 = vector.broadcast %cst_34 : f32 to vector<16x128xf32>
      %65 = arith.cmpf oeq, %4, %64 : vector<16x128xf32>
      %cst_35 = arith.constant 2.000000e+00 : f32
      %66 = vector.broadcast %cst_35 : f32 to vector<16x128xf32>
      %67 = arith.cmpf oeq, %6, %66 : vector<16x128xf32>
      %68 = arith.andi %67, %23 : vector<16x128xi1>
      %69 = arith.extui %65 : vector<16x128xi1> to vector<16x128xi32>
      %70 = arith.sitofp %69 : vector<16x128xi32> to vector<16x128xf32>
      %71 = arith.extui %68 : vector<16x128xi1> to vector<16x128xi32>
      %72 = arith.sitofp %71 : vector<16x128xi32> to vector<16x128xf32>
      %c0_36 = arith.constant 0 : index
      %c1_37 = arith.constant 1 : index
      %c0_38 = arith.constant 0 : index
      %73 = vector.load %arg5[%c0_36, %c1_37, %c0_38] : memref<3x4x128xf32, #tpu.memory_space<vmem>>, vector<1x1x128xf32>
      %74 = vector.shape_cast %73 : vector<1x1x128xf32> to vector<1x128xf32>
      %75 = arith.mulf %70, %72 : vector<16x128xf32>
      %cst_39 = arith.constant dense<0.000000e+00> : vector<128xf32>
      %76 = vector.multi_reduction <add>, %75, %cst_39 [0] : vector<16x128xf32> to vector<128xf32>
      %77 = vector.shape_cast %76 : vector<128xf32> to vector<1x128xf32>
      %78 = arith.addf %74, %77 : vector<1x128xf32>
      %c0_40 = arith.constant 0 : index
      %c1_41 = arith.constant 1 : index
      %c0_42 = arith.constant 0 : index
      %79 = vector.load %arg5[%c0_40, %c1_41, %c0_42] : memref<3x4x128xf32, #tpu.memory_space<vmem>>, vector<1x1x128xf32>
      %80 = vector.shape_cast %79 : vector<1x1x128xf32> to vector<1x128xf32>
      %81 = vector.shape_cast %78 : vector<1x128xf32> to vector<1x1x128xf32>
      tpu.vector_store %arg5[%c0_40, %c1_41, %c0_42], %81 {strides = array<i32>} : memref<3x4x128xf32, #tpu.memory_space<vmem>>, vector<1x1x128xf32>,
      %c1_43 = arith.constant 1 : index
      %c1_44 = arith.constant 1 : index
      %c0_45 = arith.constant 0 : index
      %82 = vector.load %arg5[%c1_43, %c1_44, %c0_45] : memref<3x4x128xf32, #tpu.memory_space<vmem>>, vector<1x1x128xf32>
      %83 = vector.shape_cast %82 : vector<1x1x128xf32> to vector<1x128xf32>
      %84 = arith.mulf %70, %28 : vector<16x128xf32>
      %cst_46 = arith.constant dense<0.000000e+00> : vector<128xf32>
      %85 = vector.multi_reduction <add>, %84, %cst_46 [0] : vector<16x128xf32> to vector<128xf32>
      %86 = vector.shape_cast %85 : vector<128xf32> to vector<1x128xf32>
      %87 = arith.addf %83, %86 : vector<1x128xf32>
      %c1_47 = arith.constant 1 : index
      %c1_48 = arith.constant 1 : index
      %c0_49 = arith.constant 0 : index
      %88 = vector.load %arg5[%c1_47, %c1_48, %c0_49] : memref<3x4x128xf32, #tpu.memory_space<vmem>>, vector<1x1x128xf32>
      %89 = vector.shape_cast %88 : vector<1x1x128xf32> to vector<1x128xf32>
      %90 = vector.shape_cast %87 : vector<1x128xf32> to vector<1x1x128xf32>
      tpu.vector_store %arg5[%c1_47, %c1_48, %c0_49], %90 {strides = array<i32>} : memref<3x4x128xf32, #tpu.memory_space<vmem>>, vector<1x1x128xf32>,
      %c2_50 = arith.constant 2 : index
      %c1_51 = arith.constant 1 : index
      %c0_52 = arith.constant 0 : index
      %91 = vector.load %arg5[%c2_50, %c1_51, %c0_52] : memref<3x4x128xf32, #tpu.memory_space<vmem>>, vector<1x1x128xf32>
      %92 = vector.shape_cast %91 : vector<1x1x128xf32> to vector<1x128xf32>
      %cst_53 = arith.constant dense<0.000000e+00> : vector<128xf32>
      %93 = vector.multi_reduction <add>, %72, %cst_53 [0] : vector<16x128xf32> to vector<128xf32>
      %94 = vector.shape_cast %93 : vector<128xf32> to vector<1x128xf32>
      %95 = arith.addf %92, %94 : vector<1x128xf32>
      %c2_54 = arith.constant 2 : index
      %c1_55 = arith.constant 1 : index
      %c0_56 = arith.constant 0 : index
      %96 = vector.load %arg5[%c2_54, %c1_55, %c0_56] : memref<3x4x128xf32, #tpu.memory_space<vmem>>, vector<1x1x128xf32>
      %97 = vector.shape_cast %96 : vector<1x1x128xf32> to vector<1x128xf32>
      %98 = vector.shape_cast %95 : vector<1x128xf32> to vector<1x1x128xf32>
      tpu.vector_store %arg5[%c2_54, %c1_55, %c0_56], %98 {strides = array<i32>} : memref<3x4x128xf32, #tpu.memory_space<vmem>>, vector<1x1x128xf32>,
      %cst_57 = arith.constant 3.000000e+00 : f32
      %99 = vector.broadcast %cst_57 : f32 to vector<16x128xf32>
      %100 = arith.cmpf oeq, %4, %99 : vector<16x128xf32>
      %cst_58 = arith.constant 3.000000e+00 : f32
      %101 = vector.broadcast %cst_58 : f32 to vector<16x128xf32>
      %102 = arith.cmpf oeq, %6, %101 : vector<16x128xf32>
      %103 = arith.andi %102, %23 : vector<16x128xi1>
      %104 = arith.extui %100 : vector<16x128xi1> to vector<16x128xi32>
      %105 = arith.sitofp %104 : vector<16x128xi32> to vector<16x128xf32>
      %106 = arith.extui %103 : vector<16x128xi1> to vector<16x128xi32>
      %107 = arith.sitofp %106 : vector<16x128xi32> to vector<16x128xf32>
      %c0_59 = arith.constant 0 : index
      %c2_60 = arith.constant 2 : index
      %c0_61 = arith.constant 0 : index
      %108 = vector.load %arg5[%c0_59, %c2_60, %c0_61] : memref<3x4x128xf32, #tpu.memory_space<vmem>>, vector<1x1x128xf32>
      %109 = vector.shape_cast %108 : vector<1x1x128xf32> to vector<1x128xf32>
      %110 = arith.mulf %105, %107 : vector<16x128xf32>
      %cst_62 = arith.constant dense<0.000000e+00> : vector<128xf32>
      %111 = vector.multi_reduction <add>, %110, %cst_62 [0] : vector<16x128xf32> to vector<128xf32>
      %112 = vector.shape_cast %111 : vector<128xf32> to vector<1x128xf32>
      %113 = arith.addf %109, %112 : vector<1x128xf32>
      %c0_63 = arith.constant 0 : index
      %c2_64 = arith.constant 2 : index
      %c0_65 = arith.constant 0 : index
      %114 = vector.load %arg5[%c0_63, %c2_64, %c0_65] : memref<3x4x128xf32, #tpu.memory_space<vmem>>, vector<1x1x128xf32>
      %115 = vector.shape_cast %114 : vector<1x1x128xf32> to vector<1x128xf32>
      %116 = vector.shape_cast %113 : vector<1x128xf32> to vector<1x1x128xf32>
      tpu.vector_store %arg5[%c0_63, %c2_64, %c0_65], %116 {strides = array<i32>} : memref<3x4x128xf32, #tpu.memory_space<vmem>>, vector<1x1x128xf32>,
      %c1_66 = arith.constant 1 : index
      %c2_67 = arith.constant 2 : index
      %c0_68 = arith.constant 0 : index
      %117 = vector.load %arg5[%c1_66, %c2_67, %c0_68] : memref<3x4x128xf32, #tpu.memory_space<vmem>>, vector<1x1x128xf32>
      %118 = vector.shape_cast %117 : vector<1x1x128xf32> to vector<1x128xf32>
      %119 = arith.mulf %105, %28 : vector<16x128xf32>
      %cst_69 = arith.constant dense<0.000000e+00> : vector<128xf32>
      %120 = vector.multi_reduction <add>, %119, %cst_69 [0] : vector<16x128xf32> to vector<128xf32>
      %121 = vector.shape_cast %120 : vector<128xf32> to vector<1x128xf32>
      %122 = arith.addf %118, %121 : vector<1x128xf32>
      %c1_70 = arith.constant 1 : index
      %c2_71 = arith.constant 2 : index
      %c0_72 = arith.constant 0 : index
      %123 = vector.load %arg5[%c1_70, %c2_71, %c0_72] : memref<3x4x128xf32, #tpu.memory_space<vmem>>, vector<1x1x128xf32>
      %124 = vector.shape_cast %123 : vector<1x1x128xf32> to vector<1x128xf32>
      %125 = vector.shape_cast %122 : vector<1x128xf32> to vector<1x1x128xf32>
      tpu.vector_store %arg5[%c1_70, %c2_71, %c0_72], %125 {strides = array<i32>} : memref<3x4x128xf32, #tpu.memory_space<vmem>>, vector<1x1x128xf32>,
      %c2_73 = arith.constant 2 : index
      %c2_74 = arith.constant 2 : index
      %c0_75 = arith.constant 0 : index
      %126 = vector.load %arg5[%c2_73, %c2_74, %c0_75] : memref<3x4x128xf32, #tpu.memory_space<vmem>>, vector<1x1x128xf32>
      %127 = vector.shape_cast %126 : vector<1x1x128xf32> to vector<1x128xf32>
      %cst_76 = arith.constant dense<0.000000e+00> : vector<128xf32>
      %128 = vector.multi_reduction <add>, %107, %cst_76 [0] : vector<16x128xf32> to vector<128xf32>
      %129 = vector.shape_cast %128 : vector<128xf32> to vector<1x128xf32>
      %130 = arith.addf %127, %129 : vector<1x128xf32>
      %c2_77 = arith.constant 2 : index
      %c2_78 = arith.constant 2 : index
      %c0_79 = arith.constant 0 : index
      %131 = vector.load %arg5[%c2_77, %c2_78, %c0_79] : memref<3x4x128xf32, #tpu.memory_space<vmem>>, vector<1x1x128xf32>
      %132 = vector.shape_cast %131 : vector<1x1x128xf32> to vector<1x128xf32>
      %133 = vector.shape_cast %130 : vector<1x128xf32> to vector<1x1x128xf32>
      tpu.vector_store %arg5[%c2_77, %c2_78, %c0_79], %133 {strides = array<i32>} : memref<3x4x128xf32, #tpu.memory_space<vmem>>, vector<1x1x128xf32>,
      %cst_80 = arith.constant 4.000000e+00 : f32
      %134 = vector.broadcast %cst_80 : f32 to vector<16x128xf32>
      %135 = arith.cmpf oeq, %4, %134 : vector<16x128xf32>
      %cst_81 = arith.constant 4.000000e+00 : f32
      %136 = vector.broadcast %cst_81 : f32 to vector<16x128xf32>
      %137 = arith.cmpf oeq, %6, %136 : vector<16x128xf32>
      %138 = arith.andi %137, %23 : vector<16x128xi1>
      %139 = arith.extui %135 : vector<16x128xi1> to vector<16x128xi32>
      %140 = arith.sitofp %139 : vector<16x128xi32> to vector<16x128xf32>
      %141 = arith.extui %138 : vector<16x128xi1> to vector<16x128xi32>
      %142 = arith.sitofp %141 : vector<16x128xi32> to vector<16x128xf32>
      %c0_82 = arith.constant 0 : index
      %c3 = arith.constant 3 : index
      %c0_83 = arith.constant 0 : index
      %143 = vector.load %arg5[%c0_82, %c3, %c0_83] : memref<3x4x128xf32, #tpu.memory_space<vmem>>, vector<1x1x128xf32>
      %144 = vector.shape_cast %143 : vector<1x1x128xf32> to vector<1x128xf32>
      %145 = arith.mulf %140, %142 : vector<16x128xf32>
      %cst_84 = arith.constant dense<0.000000e+00> : vector<128xf32>
      %146 = vector.multi_reduction <add>, %145, %cst_84 [0] : vector<16x128xf32> to vector<128xf32>
      %147 = vector.shape_cast %146 : vector<128xf32> to vector<1x128xf32>
      %148 = arith.addf %144, %147 : vector<1x128xf32>
      %c0_85 = arith.constant 0 : index
      %c3_86 = arith.constant 3 : index
      %c0_87 = arith.constant 0 : index
      %149 = vector.load %arg5[%c0_85, %c3_86, %c0_87] : memref<3x4x128xf32, #tpu.memory_space<vmem>>, vector<1x1x128xf32>
      %150 = vector.shape_cast %149 : vector<1x1x128xf32> to vector<1x128xf32>
      %151 = vector.shape_cast %148 : vector<1x128xf32> to vector<1x1x128xf32>
      tpu.vector_store %arg5[%c0_85, %c3_86, %c0_87], %151 {strides = array<i32>} : memref<3x4x128xf32, #tpu.memory_space<vmem>>, vector<1x1x128xf32>,
      %c1_88 = arith.constant 1 : index
      %c3_89 = arith.constant 3 : index
      %c0_90 = arith.constant 0 : index
      %152 = vector.load %arg5[%c1_88, %c3_89, %c0_90] : memref<3x4x128xf32, #tpu.memory_space<vmem>>, vector<1x1x128xf32>
      %153 = vector.shape_cast %152 : vector<1x1x128xf32> to vector<1x128xf32>
      %154 = arith.mulf %140, %28 : vector<16x128xf32>
      %cst_91 = arith.constant dense<0.000000e+00> : vector<128xf32>
      %155 = vector.multi_reduction <add>, %154, %cst_91 [0] : vector<16x128xf32> to vector<128xf32>
      %156 = vector.shape_cast %155 : vector<128xf32> to vector<1x128xf32>
      %157 = arith.addf %153, %156 : vector<1x128xf32>
      %c1_92 = arith.constant 1 : index
      %c3_93 = arith.constant 3 : index
      %c0_94 = arith.constant 0 : index
      %158 = vector.load %arg5[%c1_92, %c3_93, %c0_94] : memref<3x4x128xf32, #tpu.memory_space<vmem>>, vector<1x1x128xf32>
      %159 = vector.shape_cast %158 : vector<1x1x128xf32> to vector<1x128xf32>
      %160 = vector.shape_cast %157 : vector<1x128xf32> to vector<1x1x128xf32>
      tpu.vector_store %arg5[%c1_92, %c3_93, %c0_94], %160 {strides = array<i32>} : memref<3x4x128xf32, #tpu.memory_space<vmem>>, vector<1x1x128xf32>,
      %c2_95 = arith.constant 2 : index
      %c3_96 = arith.constant 3 : index
      %c0_97 = arith.constant 0 : index
      %161 = vector.load %arg5[%c2_95, %c3_96, %c0_97] : memref<3x4x128xf32, #tpu.memory_space<vmem>>, vector<1x1x128xf32>
      %162 = vector.shape_cast %161 : vector<1x1x128xf32> to vector<1x128xf32>
      %cst_98 = arith.constant dense<0.000000e+00> : vector<128xf32>
      %163 = vector.multi_reduction <add>, %142, %cst_98 [0] : vector<16x128xf32> to vector<128xf32>
      %164 = vector.shape_cast %163 : vector<128xf32> to vector<1x128xf32>
      %165 = arith.addf %162, %164 : vector<1x128xf32>
      %c2_99 = arith.constant 2 : index
      %c3_100 = arith.constant 3 : index
      %c0_101 = arith.constant 0 : index
      %166 = vector.load %arg5[%c2_99, %c3_100, %c0_101] : memref<3x4x128xf32, #tpu.memory_space<vmem>>, vector<1x1x128xf32>
      %167 = vector.shape_cast %166 : vector<1x1x128xf32> to vector<1x128xf32>
      %168 = vector.shape_cast %165 : vector<1x128xf32> to vector<1x1x128xf32>
      tpu.vector_store %arg5[%c2_99, %c3_100, %c0_101], %168 {strides = array<i32>} : memref<3x4x128xf32, #tpu.memory_space<vmem>>, vector<1x1x128xf32>,
    } else {
    }
    %c0_i32_10 = arith.constant 0 : i32
    %17 = arith.cmpi eq, %arg1, %c0_i32_10 : i32
    %18 = arith.extui %17 : i1 to i32
    %c0_i32_11 = arith.constant 0 : i32
    %19 = arith.cmpi ne, %18, %c0_i32_11 : i32
    scf.if %19 {
      %c0_12 = arith.constant 0 : index
      %c0_13 = arith.constant 0 : index
      %c0_14 = arith.constant 0 : index
      %20 = vector.load %arg5[%c0_12, %c0_13, %c0_14] : memref<3x4x128xf32, #tpu.memory_space<vmem>>, vector<3x4x128xf32>
      %cst = arith.constant dense<0.000000e+00> : vector<3x4xf32>
      %21 = vector.multi_reduction <add>, %20, %cst [2] : vector<3x4x128xf32> to vector<3x4xf32>
      %c0_15 = arith.constant 0 : index
      %c0_16 = arith.constant 0 : index
      %c0_17 = arith.constant 0 : index
      %22 = vector.load %arg4[%c0_15, %c0_16, %c0_17] : memref<1x3x4xf32, #tpu.memory_space<vmem>>, vector<1x3x4xf32>
      %23 = vector.shape_cast %22 : vector<1x3x4xf32> to vector<3x4xf32>
      %24 = vector.shape_cast %21 : vector<3x4xf32> to vector<1x3x4xf32>
      tpu.vector_store %arg4[%c0_15, %c0_16, %c0_17], %24 {strides = array<i32>} : memref<1x3x4xf32, #tpu.memory_space<vmem>>, vector<1x3x4xf32>,
    } else {
    }
    return
  }
  func.func @transform_0(%arg0: i32, %arg1: i32) -> (i32, i32, i32) {
    %c1_i32 = arith.constant 1 : i32
    %0 = arith.muli %arg0, %c1_i32 : i32
    %1 = arith.addi %0, %arg1 : i32
    %c0_i32 = arith.constant 0 : i32
    %2 = arith.minsi %1, %c0_i32 : i32
    %c0_i32_0 = arith.constant 0 : i32
    %c0_i32_1 = arith.constant 0 : i32
    %c0_i32_2 = arith.constant 0 : i32
    return %c0_i32_0, %2, %c0_i32_1 : i32, i32, i32
  }
  func.func @transform_1(%arg0: i32, %arg1: i32) -> (i32, i32, i32) {
    %c1_i32 = arith.constant 1 : i32
    %0 = arith.muli %arg0, %c1_i32 : i32
    %1 = arith.addi %0, %arg1 : i32
    %c0_i32 = arith.constant 0 : i32
    %2 = arith.minsi %1, %c0_i32 : i32
    %c0_i32_0 = arith.constant 0 : i32
    %c0_i32_1 = arith.constant 0 : i32
    %c0_i32_2 = arith.constant 0 : i32
    return %c0_i32_0, %2, %c0_i32_1 : i32, i32, i32
  }
  func.func @transform_2(%arg0: i32, %arg1: i32) -> (i32, i32, i32) {
    %c0_i32 = arith.constant 0 : i32
    %c0_i32_0 = arith.constant 0 : i32
    %c0_i32_1 = arith.constant 0 : i32
    return %arg0, %c0_i32, %c0_i32_0 : i32, i32, i32
  }
}

</mosaic_0001>

<llo_original>
// kernel: section_seg_multiclass_dice.1
$region0: #{section_seg_multiclass_dice.1}
  #allocation0 [shape = 'u32[]', space=smem, size = 0x4, offset = 0x4, fixed_abs, tag = 'smem constant byte address 0x4 - core index']
  #allocation1 [shape = 'u32[144,128]{1,0:T(1,128)}', space=vmem, size = 0x12000, scoped, tag = 'internal scratch']
  #allocation2 [shape = 'f32[3,4,128]{2,1,0:T(4,128)}', space=vmem, size = 0x1800, scoped, tag = 'scratch operand']
  %s0 = inlined_call_operand.hbm [shape: f32[1,16,128], index: 0, kind: input, shape index: {}]
  %s1 = inlined_call_operand.hbm [shape: f32[1,16,128], index: 1, kind: input, shape index: {}]
  %s2 = inlined_call_operand.vmem [shape: f32[1,3,4], index: 2, kind: output, shape index: {}]
  %s3 = sld [smem:[#allocation0]]
  $region42: #{section_seg_multiclass_dice.1} parent=0
    _
  %s5 = ssub.s32 1, %s3
  %s6 = scalar_select 0, %s5, %s3
  $region1: #{section_seg_multiclass_dice.1} parent=0
    #allocation3 [shape = 'u8[8192]{0}', space=vmem, size = 0x2000, scoped, tag = 'input window, operand 0, single buffered']
    #allocation4 [shape = 's32[1]{0}', space=sflag, size = 0x4, scoped, tag = 'scoped memory for section_seg_multiclass_dice.1']
    #allocation5 [shape = 'u8[8192]{0}', space=vmem, size = 0x2000, scoped, tag = 'input window, operand 1, single buffered']
    #allocation6 [shape = 's32[1]{0}', space=sflag, size = 0x4, scoped, tag = 'scoped memory for section_seg_multiclass_dice.1']
    %7 = vsyncpa [#allocation4], 0
    %8 = vsyncpa [#allocation6], 0
    // Predicated region
    $region2: #{section_seg_multiclass_dice.1} parent=1 // pred_check
      _
    $region3: #{section_seg_multiclass_dice.1} parent=1 // pred_check_branch
      %10 = sbr.rel (0) target = $region5
    $region4: #{section_seg_multiclass_dice.1} parent=1 // pred_region
      %s11 = sadd.s32 0, 0
      %p12 = scmp.lt.s32.totalorder %s11, 0
      %s13 = scalar_select %p12, %s11, 0
      %s14 = smul.u32 2, %s13
      %s16 = ssub.s32 256, 256
      %17 = vsyncadd [#allocation4], %s16
      %s18 = smul.addr %s14, 128
      %s19 = scalar_lea.hbm %s0, %s18
      %s20 = sshll.u32 [#allocation3], 4
      %s21 = int_to_ptr.vmem [resolvable:$true] %s20
      %26 = dma.hbm_to_vmem [thread:$0]  %s19, 256, %s21, [#allocation4], 128, 128, 8
    $region5: #{section_seg_multiclass_dice.1} parent=1 // pred_fallthru
      _
    // Predicated region
    $region6: #{section_seg_multiclass_dice.1} parent=1 // pred_check
      _
    $region7: #{section_seg_multiclass_dice.1} parent=1 // pred_check_branch
      %28 = sbr.rel (0) target = $region9
    $region8: #{section_seg_multiclass_dice.1} parent=1 // pred_region
      %s29 = sadd.s32 0, 0
      %p30 = scmp.lt.s32.totalorder %s29, 0
      %s31 = scalar_select %p30, %s29, 0
      %s32 = smul.u32 2, %s31
      %s34 = ssub.s32 256, 256
      %35 = vsyncadd [#allocation6], %s34
      %s36 = smul.addr %s32, 128
      %s37 = scalar_lea.hbm %s1, %s36
      %s38 = sshll.u32 [#allocation5], 4
      %s39 = int_to_ptr.vmem [resolvable:$true] %s38
      %44 = dma.hbm_to_vmem [thread:$0]  %s37, 256, %s39, [#allocation6], 128, 128, 8
    $region9: #{section_seg_multiclass_dice.1} parent=1 // pred_fallthru
      _
    // Predicated region
    $region10: #{section_seg_multiclass_dice.1} parent=1 // pred_check
      _
    $region11: #{section_seg_multiclass_dice.1} parent=1 // pred_check_branch
      %46 = sbr.rel (0) target = $region13
    $region12: #{section_seg_multiclass_dice.1} parent=1 // pred_region
      %47 = dma.done [#allocation4], 256
    $region13: #{section_seg_multiclass_dice.1} parent=1 // pred_fallthru
      _
    // Predicated region
    $region14: #{section_seg_multiclass_dice.1} parent=1 // pred_check
      _
    $region15: #{section_seg_multiclass_dice.1} parent=1 // pred_check_branch
      %49 = sbr.rel (0) target = $region17
    $region16: #{section_seg_multiclass_dice.1} parent=1 // pred_region
      %50 = dma.done [#allocation6], 256
    $region17: #{section_seg_multiclass_dice.1} parent=1 // pred_fallthru
      _
    %s51 = sadd.s32 0, 0
    %p52 = scmp.lt.s32.totalorder %s51, 0
    %s53 = scalar_select %p52, %s51, 0
    %s54 = smul.u32 2, %s53
    %s55 = sadd.s32 0, 0
    %p56 = scmp.lt.s32.totalorder %s55, 0
    %s57 = scalar_select %p56, %s55, 0
    %s58 = smul.u32 2, %s57
    %p59 = scmp.eq.s32.totalorder 0, 0
    // Predicated region
    $region18: #{section_seg_multiclass_dice.1} parent=1 // pred_check
      %p60 = pneg %p59
    $region19: #{section_seg_multiclass_dice.1} parent=1 // pred_check_branch
      %62 = sbr.rel (%p60) target = $region21
    $region20: #{section_seg_multiclass_dice.1} parent=1 // pred_region
      %63 = vst [vmem:[#allocation2] sm:$0xf] 0.0
      %64 = vst [vmem:[#allocation2 + $0x4] sm:$0xf] 0.0
      %65 = vst [vmem:[#allocation2 + $0x8] sm:$0xf] 0.0
    $region21: #{section_seg_multiclass_dice.1} parent=1 // pred_fallthru
      _
    %v66 = vld [vmem:[#allocation3] sm:$0xff]
    %v67 = vld [vmem:[#allocation3 + $0x8] sm:$0xff]
    %v68 = vld [vmem:[#allocation5] sm:$0xff]
    %v69 = vld [vmem:[#allocation5 + $0x8] sm:$0xff]
    %s70 = sadd.s32 0, 0
    %s71 = smul.u32 %s70, 16
    %s72 = sadd.s32 %s71, 16
    %p73 = scmp.gt.s32.totalorder %s72, 16
    %p74 = scmp.le.s32.totalorder %s72, 16
    // Predicated region
    $region22: #{section_seg_multiclass_dice.1} parent=1 // pred_check
      %p75 = pneg %p74
    $region23: #{section_seg_multiclass_dice.1} parent=1 // pred_check_branch
      %77 = sbr.rel (%p75) target = $region25
    $region24: #{section_seg_multiclass_dice.1} parent=1 // pred_region
      %vm78 = vcmp.gt.f32.partialorder %v68, 0.0
      %vm79 = vcmp.gt.f32.partialorder %v69, 0.0
      %v80 = vsel %vm78, 1, 0
      %v81 = vsel %vm79, 1, 0
      %v82 = vcvt.s32.f32 %v80
      %v83 = vcvt.s32.f32 %v81
      %vm84 = vcmp.eq.f32.partialorder %v66, 1.0
      %vm85 = vcmp.eq.f32.partialorder %v67, 1.0
      %vm86 = vcmp.eq.f32.partialorder %v68, 1.0
      %vm87 = vcmp.eq.f32.partialorder %v69, 1.0
      %v88 = vsel %vm84, 1, 0
      %v89 = vsel %vm85, 1, 0
      %v90 = vcvt.s32.f32 %v88
      %v91 = vcvt.s32.f32 %v89
      %v92 = vsel %vm86, 1, 0
      %v93 = vsel %vm87, 1, 0
      %v94 = vcvt.s32.f32 %v92
      %v95 = vcvt.s32.f32 %v93
      %v96 = vld [vmem:[#allocation2] sm:$0x1]
      %v97 = vmul.f32 %v90, %v94
      %v98 = vmul.f32 %v91, %v95
      %v99 = vadd.f32 %v97, %v98
      %v100 = vrot.slane %v99, 4
      %v101 = vadd.f32 %v99, %v100
      %v102 = vrot.slane %v101, 2
      %v103 = vadd.f32 %v101, %v102
      %v104 = vrot.slane %v103, 1
      %v105 = vadd.f32 %v103, %v104
      %v106 = vadd.f32 %v96, %v105
      %107 = vst [vmem:[#allocation2] sm:$0x1] %v106
      %s108 = scalar_lea.vmem [#allocation2], 4
      %v109 = vld [vmem:[%s108] sm:$0x1]
      %v110 = vmul.f32 %v90, %v82
      %v111 = vmul.f32 %v91, %v83
      %v112 = vadd.f32 %v110, %v111
      %v113 = vrot.slane %v112, 4
      %v114 = vadd.f32 %v112, %v113
      %v115 = vrot.slane %v114, 2
      %v116 = vadd.f32 %v114, %v115
      %v117 = vrot.slane %v116, 1
      %v118 = vadd.f32 %v116, %v117
      %v119 = vadd.f32 %v109, %v118
      %120 = vst [vmem:[%s108] sm:$0x1] %v119
      %s121 = scalar_lea.vmem [#allocation2], 8
      %v122 = vld [vmem:[%s121] sm:$0x1]
      %v123 = vadd.f32 %v94, %v95
      %v124 = vrot.slane %v123, 4
      %v125 = vadd.f32 %v123, %v124
      %v126 = vrot.slane %v125, 2
      %v127 = vadd.f32 %v125, %v126
      %v128 = vrot.slane %v127, 1
      %v129 = vadd.f32 %v127, %v128
      %v130 = vadd.f32 %v122, %v129
      %131 = vst [vmem:[%s121] sm:$0x1] %v130
      %vm132 = vcmp.eq.f32.partialorder %v66, 2.0
      %vm133 = vcmp.eq.f32.partialorder %v67, 2.0
      %vm134 = vcmp.eq.f32.partialorder %v68, 2.0
      %vm135 = vcmp.eq.f32.partialorder %v69, 2.0
      %v136 = vsel %vm132, 1, 0
      %v137 = vsel %vm133, 1, 0
      %v138 = vcvt.s32.f32 %v136
      %v139 = vcvt.s32.f32 %v137
      %v140 = vsel %vm134, 1, 0
      %v141 = vsel %vm135, 1, 0
      %v142 = vcvt.s32.f32 %v140
      %v143 = vcvt.s32.f32 %v141
      %v144 = vld [vmem:[#allocation2 + $0x1] sm:$0x1]
      %v145 = vmul.f32 %v138, %v142
      %v146 = vmul.f32 %v139, %v143
      %v147 = vadd.f32 %v145, %v146
      %v148 = vrot.slane %v147, 4
      %v149 = vadd.f32 %v147, %v148
      %v150 = vrot.slane %v149, 2
      %v151 = vadd.f32 %v149, %v150
      %v152 = vrot.slane %v151, 1
      %v153 = vadd.f32 %v151, %v152
      %v154 = vadd.f32 %v144, %v153
      %155 = vst [vmem:[#allocation2 + $0x1] sm:$0x1] %v154
      %v156 = vld [vmem:[%s108 + $0x1] sm:$0x1]
      %v157 = vmul.f32 %v138, %v82
      %v158 = vmul.f32 %v139, %v83
      %v159 = vadd.f32 %v157, %v158
      %v160 = vrot.slane %v159, 4
      %v161 = vadd.f32 %v159, %v160
      %v162 = vrot.slane %v161, 2
      %v163 = vadd.f32 %v161, %v162
      %v164 = vrot.slane %v163, 1
      %v165 = vadd.f32 %v163, %v164
      %v166 = vadd.f32 %v156, %v165
      %167 = vst [vmem:[%s108 + $0x1] sm:$0x1] %v166
      %v168 = vld [vmem:[%s121 + $0x1] sm:$0x1]
      %v169 = vadd.f32 %v142, %v143
      %v170 = vrot.slane %v169, 4
      %v171 = vadd.f32 %v169, %v170
      %v172 = vrot.slane %v171, 2
      %v173 = vadd.f32 %v171, %v172
      %v174 = vrot.slane %v173, 1
      %v175 = vadd.f32 %v173, %v174
      %v176 = vadd.f32 %v168, %v175
      %177 = vst [vmem:[%s121 + $0x1] sm:$0x1] %v176
      %vm178 = vcmp.eq.f32.partialorder %v66, 3.0
      %vm179 = vcmp.eq.f32.partialorder %v67, 3.0
      %vm180 = vcmp.eq.f32.partialorder %v68, 3.0
      %vm181 = vcmp.eq.f32.partialorder %v69, 3.0
      %v182 = vsel %vm178, 1, 0
      %v183 = vsel %vm179, 1, 0
      %v184 = vcvt.s32.f32 %v182
      %v185 = vcvt.s32.f32 %v183
      %v186 = vsel %vm180, 1, 0
      %v187 = vsel %vm181, 1, 0
      %v188 = vcvt.s32.f32 %v186
      %v189 = vcvt.s32.f32 %v187
      %v190 = vld [vmem:[#allocation2 + $0x2] sm:$0x1]
      %v191 = vmul.f32 %v184, %v188
      %v192 = vmul.f32 %v185, %v189
      %v193 = vadd.f32 %v191, %v192
      %v194 = vrot.slane %v193, 4
      %v195 = vadd.f32 %v193, %v194
      %v196 = vrot.slane %v195, 2
      %v197 = vadd.f32 %v195, %v196
      %v198 = vrot.slane %v197, 1
      %v199 = vadd.f32 %v197, %v198
      %v200 = vadd.f32 %v190, %v199
      %201 = vst [vmem:[#allocation2 + $0x2] sm:$0x1] %v200
      %v202 = vld [vmem:[%s108 + $0x2] sm:$0x1]
      %v203 = vmul.f32 %v184, %v82
      %v204 = vmul.f32 %v185, %v83
      %v205 = vadd.f32 %v203, %v204
      %v206 = vrot.slane %v205, 4
      %v207 = vadd.f32 %v205, %v206
      %v208 = vrot.slane %v207, 2
      %v209 = vadd.f32 %v207, %v208
      %v210 = vrot.slane %v209, 1
      %v211 = vadd.f32 %v209, %v210
      %v212 = vadd.f32 %v202, %v211
      %213 = vst [vmem:[%s108 + $0x2] sm:$0x1] %v212
      %v214 = vld [vmem:[%s121 + $0x2] sm:$0x1]
      %v215 = vadd.f32 %v188, %v189
      %v216 = vrot.slane %v215, 4
      %v217 = vadd.f32 %v215, %v216
      %v218 = vrot.slane %v217, 2
      %v219 = vadd.f32 %v217, %v218
      %v220 = vrot.slane %v219, 1
      %v221 = vadd.f32 %v219, %v220
      %v222 = vadd.f32 %v214, %v221
      %223 = vst [vmem:[%s121 + $0x2] sm:$0x1] %v222
      %vm224 = vcmp.eq.f32.partialorder %v66, 4.0
      %vm225 = vcmp.eq.f32.partialorder %v67, 4.0
      %vm226 = vcmp.eq.f32.partialorder %v68, 4.0
      %vm227 = vcmp.eq.f32.partialorder %v69, 4.0
      %v228 = vsel %vm224, 1, 0
      %v229 = vsel %vm225, 1, 0
      %v230 = vcvt.s32.f32 %v228
      %v231 = vcvt.s32.f32 %v229
      %v232 = vsel %vm226, 1, 0
      %v233 = vsel %vm227, 1, 0
      %v234 = vcvt.s32.f32 %v232
      %v235 = vcvt.s32.f32 %v233
      %v236 = vld [vmem:[#allocation2 + $0x3] sm:$0x1]
      %v237 = vmul.f32 %v230, %v234
      %v238 = vmul.f32 %v231, %v235
      %v239 = vadd.f32 %v237, %v238
      %v240 = vrot.slane %v239, 4
      %v241 = vadd.f32 %v239, %v240
      %v242 = vrot.slane %v241, 2
      %v243 = vadd.f32 %v241, %v242
      %v244 = vrot.slane %v243, 1
      %v245 = vadd.f32 %v243, %v244
      %v246 = vadd.f32 %v236, %v245
      %247 = vst [vmem:[#allocation2 + $0x3] sm:$0x1] %v246
      %v248 = vld [vmem:[%s108 + $0x3] sm:$0x1]
      %v249 = vmul.f32 %v230, %v82
      %v250 = vmul.f32 %v231, %v83
      %v251 = vadd.f32 %v249, %v250
      %v252 = vrot.slane %v251, 4
      %v253 = vadd.f32 %v251, %v252
      %v254 = vrot.slane %v253, 2
      %v255 = vadd.f32 %v253, %v254
      %v256 = vrot.slane %v255, 1
      %v257 = vadd.f32 %v255, %v256
      %v258 = vadd.f32 %v248, %v257
      %259 = vst [vmem:[%s108 + $0x3] sm:$0x1] %v258
      %v260 = vld [vmem:[%s121 + $0x3] sm:$0x1]
      %v261 = vadd.f32 %v234, %v235
      %v262 = vrot.slane %v261, 4
      %v263 = vadd.f32 %v261, %v262
      %v264 = vrot.slane %v263, 2
      %v265 = vadd.f32 %v263, %v264
      %v266 = vrot.slane %v265, 1
      %v267 = vadd.f32 %v265, %v266
      %v268 = vadd.f32 %v260, %v267
      %269 = vst [vmem:[%s121 + $0x3] sm:$0x1] %v268
    $region25: #{section_seg_multiclass_dice.1} parent=1 // pred_fallthru
      _
    // Predicated region
    $region26: #{section_seg_multiclass_dice.1} parent=1 // pred_check
      %p270 = pneg %p73
    $region27: #{section_seg_multiclass_dice.1} parent=1 // pred_check_branch
      %272 = sbr.rel (%p270) target = $region29
    $region28: #{section_seg_multiclass_dice.1} parent=1 // pred_region
      %v273 = vlaneseq
      %v274 = vshrl.u32 %v273, 7
      %v275 = vadd.s32 %v274, 8
      %s276 = ssub.s32 16, %s71
      %v277 = vstv %s276
      %vm278 = vcmp.lt.s32.totalorder %v274, %v277
      %vm279 = vcmp.lt.s32.totalorder %v275, %v277
      %vm280 = vcmp.gt.f32.partialorder %v68, 0.0
      %vm281 = vcmp.gt.f32.partialorder %v69, 0.0
      %vm282 = vmand %vm280, %vm278
      %vm283 = vmand %vm281, %vm279
      %v284 = vsel %vm282, 1, 0
      %v285 = vsel %vm283, 1, 0
      %v286 = vcvt.s32.f32 %v284
      %v287 = vcvt.s32.f32 %v285
      %vm288 = vcmp.eq.f32.partialorder %v66, 1.0
      %vm289 = vcmp.eq.f32.partialorder %v67, 1.0
      %vm290 = vcmp.eq.f32.partialorder %v68, 1.0
      %vm291 = vcmp.eq.f32.partialorder %v69, 1.0
      %vm292 = vmand %vm290, %vm278
      %vm293 = vmand %vm291, %vm279
      %v294 = vsel %vm288, 1, 0
      %v295 = vsel %vm289, 1, 0
      %v296 = vcvt.s32.f32 %v294
      %v297 = vcvt.s32.f32 %v295
      %v298 = vsel %vm292, 1, 0
      %v299 = vsel %vm293, 1, 0
      %v300 = vcvt.s32.f32 %v298
      %v301 = vcvt.s32.f32 %v299
      %v302 = vld [vmem:[#allocation2] sm:$0x1]
      %v303 = vmul.f32 %v296, %v300
      %v304 = vmul.f32 %v297, %v301
      %v305 = vadd.f32 %v303, %v304
      %v306 = vrot.slane %v305, 4
      %v307 = vadd.f32 %v305, %v306
      %v308 = vrot.slane %v307, 2
      %v309 = vadd.f32 %v307, %v308
      %v310 = vrot.slane %v309, 1
      %v311 = vadd.f32 %v309, %v310
      %v312 = vadd.f32 %v302, %v311
      %313 = vst [vmem:[#allocation2] sm:$0x1] %v312
      %s314 = scalar_lea.vmem [#allocation2], 4
      %v315 = vld [vmem:[%s314] sm:$0x1]
      %v316 = vmul.f32 %v296, %v286
      %v317 = vmul.f32 %v297, %v287
      %v318 = vadd.f32 %v316, %v317
      %v319 = vrot.slane %v318, 4
      %v320 = vadd.f32 %v318, %v319
      %v321 = vrot.slane %v320, 2
      %v322 = vadd.f32 %v320, %v321
      %v323 = vrot.slane %v322, 1
      %v324 = vadd.f32 %v322, %v323
      %v325 = vadd.f32 %v315, %v324
      %326 = vst [vmem:[%s314] sm:$0x1] %v325
      %s327 = scalar_lea.vmem [#allocation2], 8
      %v328 = vld [vmem:[%s327] sm:$0x1]
      %v329 = vadd.f32 %v300, %v301
      %v330 = vrot.slane %v329, 4
      %v331 = vadd.f32 %v329, %v330
      %v332 = vrot.slane %v331, 2
      %v333 = vadd.f32 %v331, %v332
      %v334 = vrot.slane %v333, 1
      %v335 = vadd.f32 %v333, %v334
      %v336 = vadd.f32 %v328, %v335
      %337 = vst [vmem:[%s327] sm:$0x1] %v336
      %vm338 = vcmp.eq.f32.partialorder %v66, 2.0
      %vm339 = vcmp.eq.f32.partialorder %v67, 2.0
      %vm340 = vcmp.eq.f32.partialorder %v68, 2.0
      %vm341 = vcmp.eq.f32.partialorder %v69, 2.0
      %vm342 = vmand %vm340, %vm278
      %vm343 = vmand %vm341, %vm279
      %v344 = vsel %vm338, 1, 0
      %v345 = vsel %vm339, 1, 0
      %v346 = vcvt.s32.f32 %v344
      %v347 = vcvt.s32.f32 %v345
      %v348 = vsel %vm342, 1, 0
      %v349 = vsel %vm343, 1, 0
      %v350 = vcvt.s32.f32 %v348
      %v351 = vcvt.s32.f32 %v349
      %v352 = vld [vmem:[#allocation2 + $0x1] sm:$0x1]
      %v353 = vmul.f32 %v346, %v350
      %v354 = vmul.f32 %v347, %v351
      %v355 = vadd.f32 %v353, %v354
      %v356 = vrot.slane %v355, 4
      %v357 = vadd.f32 %v355, %v356
      %v358 = vrot.slane %v357, 2
      %v359 = vadd.f32 %v357, %v358
      %v360 = vrot.slane %v359, 1
      %v361 = vadd.f32 %v359, %v360
      %v362 = vadd.f32 %v352, %v361
      %363 = vst [vmem:[#allocation2 + $0x1] sm:$0x1] %v362
      %v364 = vld [vmem:[%s314 + $0x1] sm:$0x1]
      %v365 = vmul.f32 %v346, %v286
      %v366 = vmul.f32 %v347, %v287
      %v367 = vadd.f32 %v365, %v366
      %v368 = vrot.slane %v367, 4
      %v369 = vadd.f32 %v367, %v368
      %v370 = vrot.slane %v369, 2
      %v371 = vadd.f32 %v369, %v370
      %v372 = vrot.slane %v371, 1
      %v373 = vadd.f32 %v371, %v372
      %v374 = vadd.f32 %v364, %v373
      %375 = vst [vmem:[%s314 + $0x1] sm:$0x1] %v374
      %v376 = vld [vmem:[%s327 + $0x1] sm:$0x1]
      %v377 = vadd.f32 %v350, %v351
      %v378 = vrot.slane %v377, 4
      %v379 = vadd.f32 %v377, %v378
      %v380 = vrot.slane %v379, 2
      %v381 = vadd.f32 %v379, %v380
      %v382 = vrot.slane %v381, 1
      %v383 = vadd.f32 %v381, %v382
      %v384 = vadd.f32 %v376, %v383
      %385 = vst [vmem:[%s327 + $0x1] sm:$0x1] %v384
      %vm386 = vcmp.eq.f32.partialorder %v66, 3.0
      %vm387 = vcmp.eq.f32.partialorder %v67, 3.0
      %vm388 = vcmp.eq.f32.partialorder %v68, 3.0
      %vm389 = vcmp.eq.f32.partialorder %v69, 3.0
      %vm390 = vmand %vm388, %vm278
      %vm391 = vmand %vm389, %vm279
      %v392 = vsel %vm386, 1, 0
      %v393 = vsel %vm387, 1, 0
      %v394 = vcvt.s32.f32 %v392
      %v395 = vcvt.s32.f32 %v393
      %v396 = vsel %vm390, 1, 0
      %v397 = vsel %vm391, 1, 0
      %v398 = vcvt.s32.f32 %v396
      %v399 = vcvt.s32.f32 %v397
      %v400 = vld [vmem:[#allocation2 + $0x2] sm:$0x1]
      %v401 = vmul.f32 %v394, %v398
      %v402 = vmul.f32 %v395, %v399
      %v403 = vadd.f32 %v401, %v402
      %v404 = vrot.slane %v403, 4
      %v405 = vadd.f32 %v403, %v404
      %v406 = vrot.slane %v405, 2
      %v407 = vadd.f32 %v405, %v406
      %v408 = vrot.slane %v407, 1
      %v409 = vadd.f32 %v407, %v408
      %v410 = vadd.f32 %v400, %v409
      %411 = vst [vmem:[#allocation2 + $0x2] sm:$0x1] %v410
      %v412 = vld [vmem:[%s314 + $0x2] sm:$0x1]
      %v413 = vmul.f32 %v394, %v286
      %v414 = vmul.f32 %v395, %v287
      %v415 = vadd.f32 %v413, %v414
      %v416 = vrot.slane %v415, 4
      %v417 = vadd.f32 %v415, %v416
      %v418 = vrot.slane %v417, 2
      %v419 = vadd.f32 %v417, %v418
      %v420 = vrot.slane %v419, 1
      %v421 = vadd.f32 %v419, %v420
      %v422 = vadd.f32 %v412, %v421
      %423 = vst [vmem:[%s314 + $0x2] sm:$0x1] %v422
      %v424 = vld [vmem:[%s327 + $0x2] sm:$0x1]
      %v425 = vadd.f32 %v398, %v399
      %v426 = vrot.slane %v425, 4
      %v427 = vadd.f32 %v425, %v426
      %v428 = vrot.slane %v427, 2
      %v429 = vadd.f32 %v427, %v428
      %v430 = vrot.slane %v429, 1
      %v431 = vadd.f32 %v429, %v430
      %v432 = vadd.f32 %v424, %v431
      %433 = vst [vmem:[%s327 + $0x2] sm:$0x1] %v432
      %vm434 = vcmp.eq.f32.partialorder %v66, 4.0
      %vm435 = vcmp.eq.f32.partialorder %v67, 4.0
      %vm436 = vcmp.eq.f32.partialorder %v68, 4.0
      %vm437 = vcmp.eq.f32.partialorder %v69, 4.0
      %vm438 = vmand %vm436, %vm278
      %vm439 = vmand %vm437, %vm279
      %v440 = vsel %vm434, 1, 0
      %v441 = vsel %vm435, 1, 0
      %v442 = vcvt.s32.f32 %v440
      %v443 = vcvt.s32.f32 %v441
      %v444 = vsel %vm438, 1, 0
      %v445 = vsel %vm439, 1, 0
      %v446 = vcvt.s32.f32 %v444
      %v447 = vcvt.s32.f32 %v445
      %v448 = vld [vmem:[#allocation2 + $0x3] sm:$0x1]
      %v449 = vmul.f32 %v442, %v446
      %v450 = vmul.f32 %v443, %v447
      %v451 = vadd.f32 %v449, %v450
      %v452 = vrot.slane %v451, 4
      %v453 = vadd.f32 %v451, %v452
      %v454 = vrot.slane %v453, 2
      %v455 = vadd.f32 %v453, %v454
      %v456 = vrot.slane %v455, 1
      %v457 = vadd.f32 %v455, %v456
      %v458 = vadd.f32 %v448, %v457
      %459 = vst [vmem:[#allocation2 + $0x3] sm:$0x1] %v458
      %v460 = vld [vmem:[%s314 + $0x3] sm:$0x1]
      %v461 = vmul.f32 %v442, %v286
      %v462 = vmul.f32 %v443, %v287
      %v463 = vadd.f32 %v461, %v462
      %v464 = vrot.slane %v463, 4
      %v465 = vadd.f32 %v463, %v464
      %v466 = vrot.slane %v465, 2
      %v467 = vadd.f32 %v465, %v466
      %v468 = vrot.slane %v467, 1
      %v469 = vadd.f32 %v467, %v468
      %v470 = vadd.f32 %v460, %v469
      %471 = vst [vmem:[%s314 + $0x3] sm:$0x1] %v470
      %v472 = vld [vmem:[%s327 + $0x3] sm:$0x1]
      %v473 = vadd.f32 %v446, %v447
      %v474 = vrot.slane %v473, 4
      %v475 = vadd.f32 %v473, %v474
      %v476 = vrot.slane %v475, 2
      %v477 = vadd.f32 %v475, %v476
      %v478 = vrot.slane %v477, 1
      %v479 = vadd.f32 %v477, %v478
      %v480 = vadd.f32 %v472, %v479
      %481 = vst [vmem:[%s327 + $0x3] sm:$0x1] %v480
    $region29: #{section_seg_multiclass_dice.1} parent=1 // pred_fallthru
      _
    // Predicated region
    $region30: #{section_seg_multiclass_dice.1} parent=1 // pred_check
      %p482 = pneg %p59
    $region31: #{section_seg_multiclass_dice.1} parent=1 // pred_check_branch
      %484 = sbr.rel (%p482) target = $region33
    $region32: #{section_seg_multiclass_dice.1} parent=1 // pred_region
      %v485 = vld [vmem:[#allocation2] sm:$0xf]
      %v486 = vld [vmem:[#allocation2 + $0x4] sm:$0xf]
      %v487 = vld [vmem:[#allocation2 + $0x8] sm:$0xf]
      %vm488 = vcmask 1043456
      %v489 = vsel %vm488, %v485, 0.0
      %490 = vadd.xlane.f32.xlu0 %v489
      %v491 = vpop.xlane.xlu0 %490
      %v492 = vsel %vm488, %v486, 0.0
      %493 = vadd.xlane.f32.xlu0 %v492
      %v494 = vpop.xlane.xlu0 %493
      %v495 = vsel %vm488, %v487, 0.0
      %496 = vadd.xlane.f32.xlu0 %v495
      %v497 = vpop.xlane.xlu0 %496
      %v501 = vlaneseq
      %v502 = vand.u32 %v501, 127
      %v503 = vlaneseq
      %v504 = vshrl.u32 %v503, 7
      %v505 = vsub.s32 %v502, %v504
      %v506 = vrot.slane %v491, %v505
      %v507 = vlaneseq
      %v508 = vshrl.u32 %v507, 7
      %v509 = vsub.s32 %v502, %v508
      %v510 = vrot.slane %v494, %v509
      %v511 = vlaneseq
      %v512 = vshrl.u32 %v511, 7
      %v513 = vsub.s32 %v502, %v512
      %v514 = vrot.slane %v497, %v513
      %vm515 = vcmask 1041409
      %v516 = vsel %vm515, %v510, %v506
      %vm517 = vcmask 1042434
      %v518 = vsel %vm517, %v514, %v516
      %vm520 = vcmask 26624
      %521 = vst.msk [vmem:[%s2] sm:$0x7] %vm520, %v518
    $region33: #{section_seg_multiclass_dice.1} parent=1 // pred_fallthru
      _
    // Predicated region
    $region34: #{section_seg_multiclass_dice.1} parent=1 // pred_check
      _
    $region35: #{section_seg_multiclass_dice.1} parent=1 // pred_check_branch
      %523 = sbr.rel (0) target = $region37
    $region36: #{section_seg_multiclass_dice.1} parent=1 // pred_region
      _
    $region37: #{section_seg_multiclass_dice.1} parent=1 // pred_fallthru
      _
    // Predicated region
    $region38: #{section_seg_multiclass_dice.1} parent=1 // pred_check
      _
    $region39: #{section_seg_multiclass_dice.1} parent=1 // pred_check_branch
      %525 = sbr.rel (0) target = $region41
    $region40: #{section_seg_multiclass_dice.1} parent=1 // pred_region
      _
    $region41: #{section_seg_multiclass_dice.1} parent=1 // pred_fallthru
      _
    %526 = vsyncpa [#allocation4], 1
    %527 = vsyncpa [#allocation6], 1

</llo_original>
